<compile_context>
chip_gen: v5e
topology: v5e:2x2
jax: 0.10.0
libtpu: 0.0.40
codegen_flags: <defaults>
</compile_context>

<pallas_src>
import numpy as np
import jax
import jax.numpy as jnp
from jax.experimental import pallas as pl
from jax.experimental.pallas import tpu as pltpu


def _round_up(x, m):
    return ((x + m - 1) // m) * m


# ---------------------------------------------------------------------------
# Kernel: the whole forward (both net() passes + final sum) in one pallas_call
# ---------------------------------------------------------------------------
def _generator_kernel(h0_ref, w_ref, b_ref, out_ref):
    # h0_ref : (2, tb, wmax)   rows [0]: cat(x, z), rows [1]: cat(flip(x), z)
    # w_ref  : (n_hidden+2, wmax, wmax)  masked, zero-padded weights;
    #          [0..n_hidden-1] hidden layers, [n_hidden] W_last,
    #          [n_hidden+1] = flip(W_last, axis=1)
    # b_ref  : (n_hidden+1, 1, wmax); [n_hidden] = b_last + flip(b_last)
    # out_ref: (tb, wmax)   lane-dense; wrapper slices [:, :nout]
    tb = h0_ref.shape[1]
    wmax = h0_ref.shape[2]
    n_hidden = b_ref.shape[0] - 1
    w_dtype = w_ref.dtype

    # Merge the two passes along the sublane (batch) axis. tb % 8 == 0 makes
    # this a free, sublane-contiguous view -> one full-height MXU matmul per
    # layer instead of two half-filled ones.
    h = h0_ref[...].reshape(2 * tb, wmax)

    for i in range(n_hidden):  # static unroll; shapes known at trace time
        h = jnp.maximum(
            jnp.dot(h.astype(w_dtype), w_ref[i],
                    preferred_element_type=jnp.float32) + b_ref[i],
            0.0,
        )

    # Last (un-ReLU'd) layer. The flip of y2 along the feature axis is folded
    # into w_ref[n_hidden + 1] = flip(W_last) and
    # b_ref[n_hidden] = b_last + flip(b_last):
    #   out = y1 + flip(y2) = hA @ W_last + hB @ flip(W_last) + (b + flip(b)).
    h_a = h[:tb]
    h_b = h[tb:]
    out_ref[...] = (
        jnp.dot(h_a.astype(w_dtype), w_ref[n_hidden],
                preferred_element_type=jnp.float32)
        + jnp.dot(h_b.astype(w_dtype), w_ref[n_hidden + 1],
                  preferred_element_type=jnp.float32)
        + b_ref[n_hidden]
    ).astype(out_ref.dtype)


# ---------------------------------------------------------------------------
# Host-side setup: MADE masks (mirrors Generator.update_masks, num_masks=1)
# ---------------------------------------------------------------------------
def build_made_masks(nin, hidden_sizes, nout, seed=0):
    L = len(hidden_sizes)
    rng = np.random.RandomState(seed)
    m = {}
    m[-1] = np.arange(nin, 2 * nin)
    for l in range(L):
        m[l] = rng.randint(m[l - 1].min(), 2 * nin - 1, size=hidden_sizes[l])
    m[-1] = np.arange(2 * nin)
    masks = [m[l - 1][:, None] <= m[l][None, :] for l in range(L)]
    m[-1] = np.arange(nin, 2 * nin)
    masks.append(m[L - 1][:, None] < m[-1][None, :])
    if nout > nin:
        k = int(nout / nin)
        masks[-1] = np.concatenate([masks[-1]] * k, axis=1)
    # masks[i] already has JAX [in_features, out_features] layout
    return [mk.astype(np.float32) for mk in masks]


def init_generator_params(key, nin, hidden_sizes, nout):
    """nn.Linear-style init; weights stored as [in, out] (transpose of torch)."""
    hs = [2 * nin] + list(hidden_sizes) + [nout]
    weights, biases = [], []
    keys = jax.random.split(key, len(hs) - 1)
    for k, (h0, h1) in zip(keys, zip(hs, hs[1:])):
        kw, kb = jax.random.split(k)
        bound = 1.0 / np.sqrt(h0)
        weights.append(jax.random.uniform(kw, (h0, h1), jnp.float32, -bound, bound))
        biases.append(jax.random.uniform(kb, (h1,), jnp.float32, -bound, bound))
    return weights, biases


# ---------------------------------------------------------------------------
# Host-side packing: mask, fold flips, zero-pad to a lane-dense square width
# ---------------------------------------------------------------------------
def pack_generator_params(weights, biases, masks, *, weight_dtype=jnp.float32):
    mw = [jnp.asarray(w, jnp.float32) * jnp.asarray(m, jnp.float32)
          for w, m in zip(weights, masks)]
    biases = [jnp.asarray(b, jnp.float32) for b in biases]
    dims = [w.shape[0] for w in mw] + [mw[-1].shape[1]]
    # Round up to the native lane width: full vregs everywhere, no masked
    # lane ops, unmasked (lane-dense) output stores.
    wmax = _round_up(int(max(dims)), 128)

    def pad_w(w):
        out = jnp.zeros((wmax, wmax), jnp.float32)
        out = out.at[: w.shape[0], : w.shape[1]].set(w)
        # Cast AFTER masking so MADE zeros stay exact (e.g. in bf16).
        return out.astype(weight_dtype)

    def pad_b(b):
        return jnp.zeros((1, wmax), jnp.float32).at[0, : b.shape[0]].set(b)

    w_last, b_last = mw[-1], biases[-1]
    w_stack = jnp.stack(
        [pad_w(w) for w in mw[:-1]] + [pad_w(w_last), pad_w(w_last[:, ::-1])]
    )                                                    # (n_hidden+2, wmax, wmax)
    b_stack = jnp.stack(
        [pad_b(b) for b in biases[:-1]] + [pad_b(b_last + b_last[::-1])]
    )                                                    # (n_hidden+1, 1, wmax)
    return {
        "w_stack": w_stack,
        "b_stack": b_stack,
        "wmax": wmax,
        "nout": int(w_last.shape[1]),
        "din": int(mw[0].shape[0]),
    }


# ---------------------------------------------------------------------------
# Forward wrapper
# ---------------------------------------------------------------------------
def generator_forward(x, z, packed, *, block_b=None):
    B = x.shape[0]
    wmax, nout, din = packed["wmax"], packed["nout"], packed["din"]
    w_stack, b_stack = packed["w_stack"], packed["b_stack"]
    n_w, n_b = w_stack.shape[0], b_stack.shape[0]

    # Host-side (free in XLA): concat, flip of x, stacking of the two passes.
    h0a = jnp.concatenate([x, z], axis=1).astype(jnp.float32)
    h0b = jnp.concatenate([x[:, ::-1], z], axis=1).astype(jnp.float32)
    h0 = jnp.stack([h0a, h0b])                                # (2, B, din)

    # Pad batch to a sublane multiple; pick a batch tile that gives >= 2 grid
    # steps for larger batches (DMA/compute pipelining, v7x dual-TC sharding).
    B_pad = _round_up(B, 8)
    if block_b is None:
        if B_pad <= 8:
            block_b = 8
        else:
            block_b = min(512, _round_up((B_pad + 1) // 2, 8))
    assert block_b % 8 == 0, "batch tile must be a sublane multiple"
    B_pad = _round_up(B_pad, block_b)

    h0 = jnp.pad(h0, ((0, 0), (0, B_pad - B), (0, wmax - din)))
    grid = (B_pad // block_b,)

    # Rough VMEM budget (resident weights + double-buffered activation tiles);
    # only raise the scoped limit when the default would be tight (v5e 16 MiB,
    # v7x 32 MiB scoped / 64 MiB physical).
    act_bytes = block_b * wmax * 4
    est = (w_stack.size * w_stack.dtype.itemsize
           + b_stack.size * b_stack.dtype.itemsize
           + 2 * 2 * act_bytes        # double-buffered h0 tiles
           + 2 * act_bytes            # double-buffered output tiles
           + 6 * act_bytes)           # in-kernel activation headroom
    cp_kwargs = dict(dimension_semantics=("parallel",))
    if est > 24 * 1024 * 1024:
        cp_kwargs["vmem_limit_bytes"] = min(int(est * 1.25), 100 * 1024 * 1024)
    compiler_params = pltpu.CompilerParams(**cp_kwargs)

    def _run(single_buffer_weights):
        # Constant index_map -> weights/biases DMA'd once, VMEM-resident
        # across all batch tiles; single-buffer them to halve their footprint.
        wb_kwargs = (
            {"pipeline_mode": pl.Buffered(buffer_count=1)}
            if single_buffer_weights else {}
        )
        in_specs = [
            pl.BlockSpec((2, block_b, wmax), lambda i: (0, i, 0)),
            pl.BlockSpec((n_w, wmax, wmax), lambda i: (0, 0, 0), **wb_kwargs),
            pl.BlockSpec((n_b, 1, wmax), lambda i: (0, 0, 0), **wb_kwargs),
        ]
        return pl.pallas_call(
            _generator_kernel,
            out_shape=jax.ShapeDtypeStruct((B_pad, wmax), jnp.float32),
            grid=grid,
            in_specs=in_specs,
            # Lane-dense output (full padded width); slice in the wrapper.
            out_specs=pl.BlockSpec((block_b, wmax), lambda i: (i, 0)),
            compiler_params=compiler_params,
        )(h0, w_stack, b_stack)

    try:
        out = _run(True)
    except Exception:
        # Fallback if this JAX build rejects single-buffered pipeline_mode.
        out = _run(False)

    return out[:B, :nout]


# ---------------------------------------------------------------------------
# Pure-JAX reference (correctness check only)
# ---------------------------------------------------------------------------
def _ref_generator_forward(x, z, weights, biases, masks):
    def net(h):
        n = len(weights)
        for i, (w, b, m) in enumerate(zip(weights, biases, masks)):
            h = h @ (jnp.asarray(w) * jnp.asarray(m, jnp.float32)) + jnp.asarray(b)
            if i < n - 1:
                h = jnp.maximum(h, 0.0)
        return h

    y1 = net(jnp.concatenate([x, z], axis=1))
    y2 = net(jnp.concatenate([x[:, ::-1], z], axis=1))
    return y1 + y2[:, ::-1]


# ---------------------------------------------------------------------------
if __name__ == "__main__":
    nin = 16
    hidden_sizes = [32, 32]
    nout = 2 * nin            # e.g. (mean, std) per input dim
    batch = 8

    key = jax.random.PRNGKey(0)
    kx, kz, kp = jax.random.split(key, 3)
    x = jax.random.normal(kx, (batch, nin), jnp.float32)
    z = jax.random.normal(kz, (batch, nin), jnp.float32)

    masks = build_made_masks(nin, hidden_sizes, nout, seed=0)
    weights, biases = init_generator_params(kp, nin, hidden_sizes, nout)
    packed = pack_generator_params(weights, biases, masks)   # f32 weights here;
    # use weight_dtype=jnp.bfloat16 on v6e/v7x for halved weight DMA/VMEM.

    out = generator_forward(x, z, packed)
    out = jax.block_until_ready(out)

    ref = _ref_generator_forward(x, z, weights, biases, masks)

    assert out.shape == (batch, nout)
    max_err = float(jnp.max(jnp.abs(out - ref)))
    assert jnp.allclose(out, ref, atol=1e-4, rtol=1e-4), max_err

    print("KERNEL_OK")
</pallas_src>

<mosaic_0001>
module attributes {stable_mosaic.version = 11 : i64} {
  func.func @_generator_kernel(%arg0: i32, %arg1: memref<2x8x128xf32, #tpu.memory_space<vmem>>, %arg2: memref<4x128x128xf32, #tpu.memory_space<vmem>>, %arg3: memref<3x1x128xf32, #tpu.memory_space<vmem>>, %arg4: memref<8x128xf32, #tpu.memory_space<vmem>>) attributes {dimension_semantics = [#tpu.dimension_semantics<parallel>], iteration_bounds = array<i64: 1>, scalar_prefetch = 0 : i64, scratch_operands = 0 : i64, tpu.core_type = #tpu.core_type<tc>, window_params = [{transform_indices = @transform_0, window_bounds = array<i64: 2, 8, 128>}, {pipeline_mode = #tpu.pipeline_mode<synchronous>, transform_indices = @transform_1, window_bounds = array<i64: 4, 128, 128>}, {pipeline_mode = #tpu.pipeline_mode<synchronous>, transform_indices = @transform_2, window_bounds = array<i64: 3, 1, 128>}, {transform_indices = @transform_3, window_bounds = array<i64: 8, 128>}]} {
    %c0 = arith.constant 0 : index
    %c0_0 = arith.constant 0 : index
    %c0_1 = arith.constant 0 : index
    %0 = vector.load %arg1[%c0, %c0_0, %c0_1] : memref<2x8x128xf32, #tpu.memory_space<vmem>>, vector<2x8x128xf32>
    %1 = vector.shape_cast %0 : vector<2x8x128xf32> to vector<16x128xf32>
    %c0_2 = arith.constant 0 : index
    %c0_3 = arith.constant 0 : index
    %c0_4 = arith.constant 0 : index
    %2 = vector.load %arg2[%c0_2, %c0_3, %c0_4] : memref<4x128x128xf32, #tpu.memory_space<vmem>>, vector<1x128x128xf32>
    %3 = vector.shape_cast %2 : vector<1x128x128xf32> to vector<128x128xf32>
    %cst = arith.constant dense<0.000000e+00> : vector<16x128xf32>
    %4 = tpu.matmul %1, %3, %cst {dimension_numbers = #tpu.dot_dimension_numbers<[1], [0], [0], [1], [0, 0, 1, 1], [], []>} : vector<16x128xf32>, vector<128x128xf32>, vector<16x128xf32> -> vector<16x128xf32>
    %c0_5 = arith.constant 0 : index
    %c0_6 = arith.constant 0 : index
    %c0_7 = arith.constant 0 : index
    %5 = vector.load %arg3[%c0_5, %c0_6, %c0_7] : memref<3x1x128xf32, #tpu.memory_space<vmem>>, vector<1x1x128xf32>
    %6 = vector.shape_cast %5 : vector<1x1x128xf32> to vector<1x128xf32>
    %7 = vector.broadcast %6 : vector<1x128xf32> to vector<16x128xf32>
    %8 = arith.addf %4, %7 : vector<16x128xf32>
    %cst_8 = arith.constant 0.000000e+00 : f32
    %9 = vector.broadcast %cst_8 : f32 to vector<16x128xf32>
    %10 = arith.maximumf %8, %9 : vector<16x128xf32>
    %c1 = arith.constant 1 : index
    %c0_9 = arith.constant 0 : index
    %c0_10 = arith.constant 0 : index
    %11 = vector.load %arg2[%c1, %c0_9, %c0_10] : memref<4x128x128xf32, #tpu.memory_space<vmem>>, vector<1x128x128xf32>
    %12 = vector.shape_cast %11 : vector<1x128x128xf32> to vector<128x128xf32>
    %cst_11 = arith.constant dense<0.000000e+00> : vector<16x128xf32>
    %13 = tpu.matmul %10, %12, %cst_11 {dimension_numbers = #tpu.dot_dimension_numbers<[1], [0], [0], [1], [0, 0, 1, 1], [], []>} : vector<16x128xf32>, vector<128x128xf32>, vector<16x128xf32> -> vector<16x128xf32>
    %c1_12 = arith.constant 1 : index
    %c0_13 = arith.constant 0 : index
    %c0_14 = arith.constant 0 : index
    %14 = vector.load %arg3[%c1_12, %c0_13, %c0_14] : memref<3x1x128xf32, #tpu.memory_space<vmem>>, vector<1x1x128xf32>
    %15 = vector.shape_cast %14 : vector<1x1x128xf32> to vector<1x128xf32>
    %16 = vector.broadcast %15 : vector<1x128xf32> to vector<16x128xf32>
    %17 = arith.addf %13, %16 : vector<16x128xf32>
    %cst_15 = arith.constant 0.000000e+00 : f32
    %18 = vector.broadcast %cst_15 : f32 to vector<16x128xf32>
    %19 = arith.maximumf %17, %18 : vector<16x128xf32>
    %20 = vector.extract_strided_slice %19 {offsets = [0, 0], sizes = [8, 128], strides = [1, 1]} : vector<16x128xf32> to vector<8x128xf32>
    %21 = vector.extract_strided_slice %19 {offsets = [8, 0], sizes = [8, 128], strides = [1, 1]} : vector<16x128xf32> to vector<8x128xf32>
    %c2 = arith.constant 2 : index
    %c0_16 = arith.constant 0 : index
    %c0_17 = arith.constant 0 : index
    %22 = vector.load %arg2[%c2, %c0_16, %c0_17] : memref<4x128x128xf32, #tpu.memory_space<vmem>>, vector<1x128x128xf32>
    %23 = vector.shape_cast %22 : vector<1x128x128xf32> to vector<128x128xf32>
    %cst_18 = arith.constant dense<0.000000e+00> : vector<8x128xf32>
    %24 = tpu.matmul %20, %23, %cst_18 {dimension_numbers = #tpu.dot_dimension_numbers<[1], [0], [0], [1], [0, 0, 1, 1], [], []>} : vector<8x128xf32>, vector<128x128xf32>, vector<8x128xf32> -> vector<8x128xf32>
    %c3 = arith.constant 3 : index
    %c0_19 = arith.constant 0 : index
    %c0_20 = arith.constant 0 : index
    %25 = vector.load %arg2[%c3, %c0_19, %c0_20] : memref<4x128x128xf32, #tpu.memory_space<vmem>>, vector<1x128x128xf32>
    %26 = vector.shape_cast %25 : vector<1x128x128xf32> to vector<128x128xf32>
    %cst_21 = arith.constant dense<0.000000e+00> : vector<8x128xf32>
    %27 = tpu.matmul %21, %26, %cst_21 {dimension_numbers = #tpu.dot_dimension_numbers<[1], [0], [0], [1], [0, 0, 1, 1], [], []>} : vector<8x128xf32>, vector<128x128xf32>, vector<8x128xf32> -> vector<8x128xf32>
    %28 = arith.addf %24, %27 : vector<8x128xf32>
    %c2_22 = arith.constant 2 : index
    %c0_23 = arith.constant 0 : index
    %c0_24 = arith.constant 0 : index
    %29 = vector.load %arg3[%c2_22, %c0_23, %c0_24] : memref<3x1x128xf32, #tpu.memory_space<vmem>>, vector<1x1x128xf32>
    %30 = vector.shape_cast %29 : vector<1x1x128xf32> to vector<1x128xf32>
    %31 = vector.broadcast %30 : vector<1x128xf32> to vector<8x128xf32>
    %32 = arith.addf %28, %31 : vector<8x128xf32>
    %c0_25 = arith.constant 0 : index
    %c0_26 = arith.constant 0 : index
    %33 = vector.load %arg4[%c0_25, %c0_26] : memref<8x128xf32, #tpu.memory_space<vmem>>, vector<8x128xf32>
    tpu.vector_store %arg4[%c0_25, %c0_26], %32 {strides = array<i32>} : memref<8x128xf32, #tpu.memory_space<vmem>>, vector<8x128xf32>,
    return
  }
  func.func @transform_0(%arg0: i32) -> (i32, i32, i32) {
    %c0_i32 = arith.constant 0 : i32
    %c0_i32_0 = arith.constant 0 : i32
    %c0_i32_1 = arith.constant 0 : i32
    return %c0_i32, %arg0, %c0_i32_0 : i32, i32, i32
  }
  func.func @transform_1(%arg0: i32) -> (i32, i32, i32) {
    %c0_i32 = arith.constant 0 : i32
    %c0_i32_0 = arith.constant 0 : i32
    %c0_i32_1 = arith.constant 0 : i32
    %c0_i32_2 = arith.constant 0 : i32
    return %c0_i32, %c0_i32_0, %c0_i32_1 : i32, i32, i32
  }
  func.func @transform_2(%arg0: i32) -> (i32, i32, i32) {
    %c0_i32 = arith.constant 0 : i32
    %c0_i32_0 = arith.constant 0 : i32
    %c0_i32_1 = arith.constant 0 : i32
    %c0_i32_2 = arith.constant 0 : i32
    return %c0_i32, %c0_i32_0, %c0_i32_1 : i32, i32, i32
  }
  func.func @transform_3(%arg0: i32) -> (i32, i32) {
    %c0_i32 = arith.constant 0 : i32
    %c0_i32_0 = arith.constant 0 : i32
    return %arg0, %c0_i32 : i32, i32
  }
}

module attributes {stable_mosaic.version = 11 : i64} {
  func.func @_generator_kernel(%arg0: i32, %arg1: memref<2x8x128xf32, #tpu.memory_space<vmem>>, %arg2: memref<4x128x128xf32, #tpu.memory_space<vmem>>, %arg3: memref<3x1x128xf32, #tpu.memory_space<vmem>>, %arg4: memref<8x128xf32, #tpu.memory_space<vmem>>) attributes {dimension_semantics = [#tpu.dimension_semantics<parallel>], iteration_bounds = array<i64: 1>, scalar_prefetch = 0 : i64, scratch_operands = 0 : i64, tpu.core_type = #tpu.core_type<tc>, window_params = [{transform_indices = @transform_0, window_bounds = array<i64: 2, 8, 128>}, {pipeline_mode = #tpu.pipeline_mode<synchronous>, transform_indices = @transform_1, window_bounds = array<i64: 4, 128, 128>}, {pipeline_mode = #tpu.pipeline_mode<synchronous>, transform_indices = @transform_2, window_bounds = array<i64: 3, 1, 128>}, {transform_indices = @transform_3, window_bounds = array<i64: 8, 128>}]} {
    %c0 = arith.constant 0 : index
    %c0_0 = arith.constant 0 : index
    %c0_1 = arith.constant 0 : index
    %0 = vector.load %arg1[%c0, %c0_0, %c0_1] : memref<2x8x128xf32, #tpu.memory_space<vmem>>, vector<2x8x128xf32>
    %1 = vector.shape_cast %0 : vector<2x8x128xf32> to vector<16x128xf32>
    %c0_2 = arith.constant 0 : index
    %c0_3 = arith.constant 0 : index
    %c0_4 = arith.constant 0 : index
    %2 = vector.load %arg2[%c0_2, %c0_3, %c0_4] : memref<4x128x128xf32, #tpu.memory_space<vmem>>, vector<1x128x128xf32>
    %3 = vector.shape_cast %2 : vector<1x128x128xf32> to vector<128x128xf32>
    %cst = arith.constant dense<0.000000e+00> : vector<16x128xf32>
    %4 = tpu.matmul %1, %3, %cst {dimension_numbers = #tpu.dot_dimension_numbers<[1], [0], [0], [1], [0, 0, 1, 1], [], []>} : vector<16x128xf32>, vector<128x128xf32>, vector<16x128xf32> -> vector<16x128xf32>
    %c0_5 = arith.constant 0 : index
    %c0_6 = arith.constant 0 : index
    %c0_7 = arith.constant 0 : index
    %5 = vector.load %arg3[%c0_5, %c0_6, %c0_7] : memref<3x1x128xf32, #tpu.memory_space<vmem>>, vector<1x1x128xf32>
    %6 = vector.shape_cast %5 : vector<1x1x128xf32> to vector<1x128xf32>
    %7 = vector.broadcast %6 : vector<1x128xf32> to vector<16x128xf32>
    %8 = arith.addf %4, %7 : vector<16x128xf32>
    %cst_8 = arith.constant 0.000000e+00 : f32
    %9 = vector.broadcast %cst_8 : f32 to vector<16x128xf32>
    %10 = arith.maximumf %8, %9 : vector<16x128xf32>
    %c1 = arith.constant 1 : index
    %c0_9 = arith.constant 0 : index
    %c0_10 = arith.constant 0 : index
    %11 = vector.load %arg2[%c1, %c0_9, %c0_10] : memref<4x128x128xf32, #tpu.memory_space<vmem>>, vector<1x128x128xf32>
    %12 = vector.shape_cast %11 : vector<1x128x128xf32> to vector<128x128xf32>
    %cst_11 = arith.constant dense<0.000000e+00> : vector<16x128xf32>
    %13 = tpu.matmul %10, %12, %cst_11 {dimension_numbers = #tpu.dot_dimension_numbers<[1], [0], [0], [1], [0, 0, 1, 1], [], []>} : vector<16x128xf32>, vector<128x128xf32>, vector<16x128xf32> -> vector<16x128xf32>
    %c1_12 = arith.constant 1 : index
    %c0_13 = arith.constant 0 : index
    %c0_14 = arith.constant 0 : index
    %14 = vector.load %arg3[%c1_12, %c0_13, %c0_14] : memref<3x1x128xf32, #tpu.memory_space<vmem>>, vector<1x1x128xf32>
    %15 = vector.shape_cast %14 : vector<1x1x128xf32> to vector<1x128xf32>
    %16 = vector.broadcast %15 : vector<1x128xf32> to vector<16x128xf32>
    %17 = arith.addf %13, %16 : vector<16x128xf32>
    %cst_15 = arith.constant 0.000000e+00 : f32
    %18 = vector.broadcast %cst_15 : f32 to vector<16x128xf32>
    %19 = arith.maximumf %17, %18 : vector<16x128xf32>
    %20 = vector.extract_strided_slice %19 {offsets = [0, 0], sizes = [8, 128], strides = [1, 1]} : vector<16x128xf32> to vector<8x128xf32>
    %21 = vector.extract_strided_slice %19 {offsets = [8, 0], sizes = [8, 128], strides = [1, 1]} : vector<16x128xf32> to vector<8x128xf32>
    %c2 = arith.constant 2 : index
    %c0_16 = arith.constant 0 : index
    %c0_17 = arith.constant 0 : index
    %22 = vector.load %arg2[%c2, %c0_16, %c0_17] : memref<4x128x128xf32, #tpu.memory_space<vmem>>, vector<1x128x128xf32>
    %23 = vector.shape_cast %22 : vector<1x128x128xf32> to vector<128x128xf32>
    %cst_18 = arith.constant dense<0.000000e+00> : vector<8x128xf32>
    %24 = tpu.matmul %20, %23, %cst_18 {dimension_numbers = #tpu.dot_dimension_numbers<[1], [0], [0], [1], [0, 0, 1, 1], [], []>} : vector<8x128xf32>, vector<128x128xf32>, vector<8x128xf32> -> vector<8x128xf32>
    %c3 = arith.constant 3 : index
    %c0_19 = arith.constant 0 : index
    %c0_20 = arith.constant 0 : index
    %25 = vector.load %arg2[%c3, %c0_19, %c0_20] : memref<4x128x128xf32, #tpu.memory_space<vmem>>, vector<1x128x128xf32>
    %26 = vector.shape_cast %25 : vector<1x128x128xf32> to vector<128x128xf32>
    %cst_21 = arith.constant dense<0.000000e+00> : vector<8x128xf32>
    %27 = tpu.matmul %21, %26, %cst_21 {dimension_numbers = #tpu.dot_dimension_numbers<[1], [0], [0], [1], [0, 0, 1, 1], [], []>} : vector<8x128xf32>, vector<128x128xf32>, vector<8x128xf32> -> vector<8x128xf32>
    %28 = arith.addf %24, %27 : vector<8x128xf32>
    %c2_22 = arith.constant 2 : index
    %c0_23 = arith.constant 0 : index
    %c0_24 = arith.constant 0 : index
    %29 = vector.load %arg3[%c2_22, %c0_23, %c0_24] : memref<3x1x128xf32, #tpu.memory_space<vmem>>, vector<1x1x128xf32>
    %30 = vector.shape_cast %29 : vector<1x1x128xf32> to vector<1x128xf32>
    %31 = vector.broadcast %30 : vector<1x128xf32> to vector<8x128xf32>
    %32 = arith.addf %28, %31 : vector<8x128xf32>
    %c0_25 = arith.constant 0 : index
    %c0_26 = arith.constant 0 : index
    %33 = vector.load %arg4[%c0_25, %c0_26] : memref<8x128xf32, #tpu.memory_space<vmem>>, vector<8x128xf32>
    tpu.vector_store %arg4[%c0_25, %c0_26], %32 {strides = array<i32>} : memref<8x128xf32, #tpu.memory_space<vmem>>, vector<8x128xf32>,
    return
  }
  func.func @transform_0(%arg0: i32) -> (i32, i32, i32) {
    %c0_i32 = arith.constant 0 : i32
    %c0_i32_0 = arith.constant 0 : i32
    %c0_i32_1 = arith.constant 0 : i32
    return %c0_i32, %arg0, %c0_i32_0 : i32, i32, i32
  }
  func.func @transform_1(%arg0: i32) -> (i32, i32, i32) {
    %c0_i32 = arith.constant 0 : i32
    %c0_i32_0 = arith.constant 0 : i32
    %c0_i32_1 = arith.constant 0 : i32
    %c0_i32_2 = arith.constant 0 : i32
    return %c0_i32, %c0_i32_0, %c0_i32_1 : i32, i32, i32
  }
  func.func @transform_2(%arg0: i32) -> (i32, i32, i32) {
    %c0_i32 = arith.constant 0 : i32
    %c0_i32_0 = arith.constant 0 : i32
    %c0_i32_1 = arith.constant 0 : i32
    %c0_i32_2 = arith.constant 0 : i32
    return %c0_i32, %c0_i32_0, %c0_i32_1 : i32, i32, i32
  }
  func.func @transform_3(%arg0: i32) -> (i32, i32) {
    %c0_i32 = arith.constant 0 : i32
    %c0_i32_0 = arith.constant 0 : i32
    return %arg0, %c0_i32 : i32, i32
  }
}

</mosaic_0001>

<llo_original>
// kernel: tpu_custom_call.1
$region0: #{tpu_custom_call.1}
  #allocation0 [shape = 'u32[]', space=smem, size = 0x4, offset = 0x4, fixed_abs, tag = 'smem constant byte address 0x4 - core index']
  #allocation1 [shape = 'u32[72,128]{1,0:T(1,128)}', space=vmem, size = 0x9000, scoped, tag = 'internal scratch']
  %s0 = inlined_call_operand.hbm [shape: f32[2,8,128], index: 0, kind: input, shape index: {}]
  %s1 = inlined_call_operand.hbm [shape: f32[4,128,128], index: 1, kind: input, shape index: {}]
  %s2 = inlined_call_operand.hbm [shape: f32[3,1,128], index: 2, kind: input, shape index: {}]
  %s3 = inlined_call_operand.hbm [shape: f32[8,128], index: 3, kind: output, shape index: {}]
  %s4 = sld [smem:[#allocation0]]
  $region34: #{tpu_custom_call.1} parent=0
    _
  %s6 = ssub.s32 1, %s4
  %s7 = scalar_select 0, %s6, %s4
  $region1: #{tpu_custom_call.1} parent=0
    #allocation2 [shape = 'u8[8192]{0}', space=vmem, size = 0x2000, scoped, tag = 'input window, operand 0, single buffered']
    #allocation3 [shape = 's32[1]{0}', space=sflag, size = 0x4, scoped, tag = 'scoped memory for tpu_custom_call.1']
    #allocation4 [shape = 's32[1]{0}', space=sflag, size = 0x4, scoped, tag = 'scoped memory for tpu_custom_call.1']
    #allocation5 [shape = 'u8[262144]{0}', space=vmem, size = 0x40000, scoped, tag = 'input window, operand 1, single buffered']
    #allocation6 [shape = 's32[1]{0}', space=sflag, size = 0x4, scoped, tag = 'scoped memory for tpu_custom_call.1']
    #allocation7 [shape = 'u8[1536]{0}', space=vmem, size = 0x800, scoped, tag = 'input window, operand 2, single buffered']
    #allocation8 [shape = 'u8[4096]{0}', space=vmem, size = 0x1000, scoped, tag = 'output window, operand 0, single buffered']
    %8 = vsyncpa [#allocation3], 0
    %9 = vsyncpa [#allocation6], 0
    %10 = vsyncpa [#allocation4], 0
    // Predicated region
    $region2: #{tpu_custom_call.1} parent=1 // pred_check
      _
    $region3: #{tpu_custom_call.1} parent=1 // pred_check_branch
      %12 = sbr.rel (0) target = $region5
    $region4: #{tpu_custom_call.1} parent=1 // pred_region
      %14 = vsyncadd [#allocation3], 0
      %s15 = sshll.u32 %s0, 4
      %s16 = int_to_ptr.hbm [resolvable:$true] %s15
      %s17 = sshll.u32 [#allocation2], 4
      %s18 = int_to_ptr.vmem [resolvable:$true] %s17
      %23 = dma.hbm_to_vmem [thread:$0]  %s16, 256, %s18, [#allocation3], 128, 128, 8
    $region5: #{tpu_custom_call.1} parent=1 // pred_fallthru
      _
    // Predicated region
    $region6: #{tpu_custom_call.1} parent=1 // pred_check
      _
    $region7: #{tpu_custom_call.1} parent=1 // pred_check_branch
      %25 = sbr.rel (0) target = $region9
    $region8: #{tpu_custom_call.1} parent=1 // pred_region
      %27 = vsyncadd [#allocation6], 0
      %s28 = sshll.u32 %s1, 4
      %s29 = int_to_ptr.hbm [resolvable:$true] %s28
      %s30 = sshll.u32 [#allocation5], 4
      %s31 = int_to_ptr.vmem [resolvable:$true] %s30
      %36 = dma.hbm_to_vmem [thread:$0]  %s29, 8192, %s31, [#allocation6], 128, 128, 8
    $region9: #{tpu_custom_call.1} parent=1 // pred_fallthru
      _
    // Predicated region
    $region10: #{tpu_custom_call.1} parent=1 // pred_check
      _
    $region11: #{tpu_custom_call.1} parent=1 // pred_check_branch
      %38 = sbr.rel (0) target = $region13
    $region12: #{tpu_custom_call.1} parent=1 // pred_region
      %40 = vsyncadd [#allocation6], 0
      %s41 = sshll.u32 %s2, 4
      %s42 = int_to_ptr.hbm [resolvable:$true] %s41
      %s43 = sshll.u32 [#allocation7], 4
      %s44 = int_to_ptr.vmem [resolvable:$true] %s43
      %49 = dma.hbm_to_vmem [thread:$0]  %s42, 48, %s44, [#allocation6], 16, 16, 1
    $region13: #{tpu_custom_call.1} parent=1 // pred_fallthru
      _
    // Predicated region
    $region14: #{tpu_custom_call.1} parent=1 // pred_check
      _
    $region15: #{tpu_custom_call.1} parent=1 // pred_check_branch
      %51 = sbr.rel (0) target = $region17
    $region16: #{tpu_custom_call.1} parent=1 // pred_region
      %53 = dma.done [#allocation3], 256
    $region17: #{tpu_custom_call.1} parent=1 // pred_fallthru
      _
    // Predicated region
    $region18: #{tpu_custom_call.1} parent=1 // pred_check
      _
    $region19: #{tpu_custom_call.1} parent=1 // pred_check_branch
      %55 = sbr.rel (0) target = $region21
    $region20: #{tpu_custom_call.1} parent=1 // pred_region
      %57 = dma.done [#allocation6], 8192
    $region21: #{tpu_custom_call.1} parent=1 // pred_fallthru
      _
    // Predicated region
    $region22: #{tpu_custom_call.1} parent=1 // pred_check
      _
    $region23: #{tpu_custom_call.1} parent=1 // pred_check_branch
      %59 = sbr.rel (0) target = $region25
    $region24: #{tpu_custom_call.1} parent=1 // pred_region
      %61 = dma.done [#allocation6], 48
    $region25: #{tpu_custom_call.1} parent=1 // pred_fallthru
      _
    %v62 = vld [vmem:[#allocation2] sm:$0xff]
    %v63 = vld [vmem:[#allocation2 + $0x8] sm:$0xff]
    %v64 = vld [vmem:[#allocation5] sm:$0xff]
    %v65 = vld [vmem:[#allocation5 + $0x8] sm:$0xff]
    %v66 = vld [vmem:[#allocation5 + $0x10] sm:$0xff]
    %v67 = vld [vmem:[#allocation5 + $0x18] sm:$0xff]
    %v68 = vld [vmem:[#allocation5 + $0x20] sm:$0xff]
    %v69 = vld [vmem:[#allocation5 + $0x28] sm:$0xff]
    %v70 = vld [vmem:[#allocation5 + $0x30] sm:$0xff]
    %v71 = vld [vmem:[#allocation5 + $0x38] sm:$0xff]
    %v72 = vld [vmem:[#allocation5 + $0x40] sm:$0xff]
    %v73 = vld [vmem:[#allocation5 + $0x48] sm:$0xff]
    %v74 = vld [vmem:[#allocation5 + $0x50] sm:$0xff]
    %v75 = vld [vmem:[#allocation5 + $0x58] sm:$0xff]
    %v76 = vld [vmem:[#allocation5 + $0x60] sm:$0xff]
    %v77 = vld [vmem:[#allocation5 + $0x68] sm:$0xff]
    %v78 = vld [vmem:[#allocation5 + $0x70] sm:$0xff]
    %v79 = vld [vmem:[#allocation5 + $0x78] sm:$0xff]
    %v80 = vld [vmem:[#allocation7] sm:$0x1]
    %v82 = vperm.slane %v80, 0
    %84 = vmatpush.msra.mxu0 %v79
    %85 = vmatpush.msra.mxu0 %v78
    %86 = vmatpush.msra.mxu0 %v77
    %87 = vmatpush.msra.mxu0 %v76
    %88 = vmatpush.msra.mxu0 %v75
    %89 = vmatpush.msra.mxu0 %v74
    %90 = vmatpush.msra.mxu0 %v73
    %91 = vmatpush.msra.mxu0 %v72
    %92 = vmatpush.msra.mxu0 %v71
    %93 = vmatpush.msra.mxu0 %v70
    %94 = vmatpush.msra.mxu0 %v69
    %95 = vmatpush.msra.mxu0 %v68
    %96 = vmatpush.msra.mxu0 %v67
    %97 = vmatpush.msra.mxu0 %v66
    %98 = vmatpush.msra.mxu0 %v65
    %99 = vmatpush.msra.mxu0 %v64
    %100 = vmatmul.f32.gmra.mxu0 %v62
    %v101 = vpop.f32.mrf.mxu0
    %v102 = vadd.f32 %v82, %v101
    %103 = vmatmul.f32.gmra.mxu0 %v63
    %v104 = vpop.f32.mrf.mxu0
    %v105 = vadd.f32 %v82, %v104
    %106 = vdwg.mxu0
    %v107 = vmax.f32 %v102, 0.0
    %v108 = vmax.f32 %v105, 0.0
    %s109 = scalar_lea.vmem [#allocation5], 128
    %v110 = vld [vmem:[%s109] sm:$0xff]
    %v111 = vld [vmem:[%s109 + $0x8] sm:$0xff]
    %v112 = vld [vmem:[%s109 + $0x10] sm:$0xff]
    %v113 = vld [vmem:[%s109 + $0x18] sm:$0xff]
    %v114 = vld [vmem:[%s109 + $0x20] sm:$0xff]
    %v115 = vld [vmem:[%s109 + $0x28] sm:$0xff]
    %v116 = vld [vmem:[%s109 + $0x30] sm:$0xff]
    %v117 = vld [vmem:[%s109 + $0x38] sm:$0xff]
    %v118 = vld [vmem:[%s109 + $0x40] sm:$0xff]
    %v119 = vld [vmem:[%s109 + $0x48] sm:$0xff]
    %v120 = vld [vmem:[%s109 + $0x50] sm:$0xff]
    %v121 = vld [vmem:[%s109 + $0x58] sm:$0xff]
    %v122 = vld [vmem:[%s109 + $0x60] sm:$0xff]
    %v123 = vld [vmem:[%s109 + $0x68] sm:$0xff]
    %v124 = vld [vmem:[%s109 + $0x70] sm:$0xff]
    %v125 = vld [vmem:[%s109 + $0x78] sm:$0xff]
    %s126 = scalar_lea.vmem [#allocation7], 1
    %v127 = vld [vmem:[%s126] sm:$0x1]
    %v129 = vperm.slane %v127, 0
    %131 = vmatpush.msra.mxu0 %v125
    %132 = vmatpush.msra.mxu0 %v124
    %133 = vmatpush.msra.mxu0 %v123
    %134 = vmatpush.msra.mxu0 %v122
    %135 = vmatpush.msra.mxu0 %v121
    %136 = vmatpush.msra.mxu0 %v120
    %137 = vmatpush.msra.mxu0 %v119
    %138 = vmatpush.msra.mxu0 %v118
    %139 = vmatpush.msra.mxu0 %v117
    %140 = vmatpush.msra.mxu0 %v116
    %141 = vmatpush.msra.mxu0 %v115
    %142 = vmatpush.msra.mxu0 %v114
    %143 = vmatpush.msra.mxu0 %v113
    %144 = vmatpush.msra.mxu0 %v112
    %145 = vmatpush.msra.mxu0 %v111
    %146 = vmatpush.msra.mxu0 %v110
    %147 = vmatmul.f32.gmra.mxu0 %v107
    %v148 = vpop.f32.mrf.mxu0
    %v149 = vadd.f32 %v129, %v148
    %150 = vmatmul.f32.gmra.mxu0 %v108
    %v151 = vpop.f32.mrf.mxu0
    %v152 = vadd.f32 %v129, %v151
    %153 = vdwg.mxu0
    %v154 = vmax.f32 %v149, 0.0
    %v155 = vmax.f32 %v152, 0.0
    %s156 = scalar_lea.vmem [#allocation5], 256
    %v157 = vld [vmem:[%s156] sm:$0xff]
    %v158 = vld [vmem:[%s156 + $0x8] sm:$0xff]
    %v159 = vld [vmem:[%s156 + $0x10] sm:$0xff]
    %v160 = vld [vmem:[%s156 + $0x18] sm:$0xff]
    %v161 = vld [vmem:[%s156 + $0x20] sm:$0xff]
    %v162 = vld [vmem:[%s156 + $0x28] sm:$0xff]
    %v163 = vld [vmem:[%s156 + $0x30] sm:$0xff]
    %v164 = vld [vmem:[%s156 + $0x38] sm:$0xff]
    %v165 = vld [vmem:[%s156 + $0x40] sm:$0xff]
    %v166 = vld [vmem:[%s156 + $0x48] sm:$0xff]
    %v167 = vld [vmem:[%s156 + $0x50] sm:$0xff]
    %v168 = vld [vmem:[%s156 + $0x58] sm:$0xff]
    %v169 = vld [vmem:[%s156 + $0x60] sm:$0xff]
    %v170 = vld [vmem:[%s156 + $0x68] sm:$0xff]
    %v171 = vld [vmem:[%s156 + $0x70] sm:$0xff]
    %v172 = vld [vmem:[%s156 + $0x78] sm:$0xff]
    %s173 = scalar_lea.vmem [#allocation5], 384
    %v174 = vld [vmem:[%s173] sm:$0xff]
    %v175 = vld [vmem:[%s173 + $0x8] sm:$0xff]
    %v176 = vld [vmem:[%s173 + $0x10] sm:$0xff]
    %v177 = vld [vmem:[%s173 + $0x18] sm:$0xff]
    %v178 = vld [vmem:[%s173 + $0x20] sm:$0xff]
    %v179 = vld [vmem:[%s173 + $0x28] sm:$0xff]
    %v180 = vld [vmem:[%s173 + $0x30] sm:$0xff]
    %v181 = vld [vmem:[%s173 + $0x38] sm:$0xff]
    %v182 = vld [vmem:[%s173 + $0x40] sm:$0xff]
    %v183 = vld [vmem:[%s173 + $0x48] sm:$0xff]
    %v184 = vld [vmem:[%s173 + $0x50] sm:$0xff]
    %v185 = vld [vmem:[%s173 + $0x58] sm:$0xff]
    %v186 = vld [vmem:[%s173 + $0x60] sm:$0xff]
    %v187 = vld [vmem:[%s173 + $0x68] sm:$0xff]
    %v188 = vld [vmem:[%s173 + $0x70] sm:$0xff]
    %v189 = vld [vmem:[%s173 + $0x78] sm:$0xff]
    %190 = vmatpush.msra.mxu0 %v189
    %191 = vmatpush.msra.mxu0 %v188
    %192 = vmatpush.msra.mxu0 %v187
    %193 = vmatpush.msra.mxu0 %v186
    %194 = vmatpush.msra.mxu0 %v185
    %195 = vmatpush.msra.mxu0 %v184
    %196 = vmatpush.msra.mxu0 %v183
    %197 = vmatpush.msra.mxu0 %v182
    %198 = vmatpush.msra.mxu0 %v181
    %199 = vmatpush.msra.mxu0 %v180
    %200 = vmatpush.msra.mxu0 %v179
    %201 = vmatpush.msra.mxu0 %v178
    %202 = vmatpush.msra.mxu0 %v177
    %203 = vmatpush.msra.mxu0 %v176
    %204 = vmatpush.msra.mxu0 %v175
    %205 = vmatpush.msra.mxu0 %v174
    %206 = vmatmul.f32.gmra.mxu0 %v155
    %v207 = vpop.f32.mrf.mxu0
    %v208 = vadd.f32 0.0, %v207
    %209 = vdwg.mxu0
    %210 = vmatpush.msra.mxu0 %v172
    %211 = vmatpush.msra.mxu0 %v171
    %212 = vmatpush.msra.mxu0 %v170
    %213 = vmatpush.msra.mxu0 %v169
    %214 = vmatpush.msra.mxu0 %v168
    %215 = vmatpush.msra.mxu0 %v167
    %216 = vmatpush.msra.mxu0 %v166
    %217 = vmatpush.msra.mxu0 %v165
    %218 = vmatpush.msra.mxu0 %v164
    %219 = vmatpush.msra.mxu0 %v163
    %220 = vmatpush.msra.mxu0 %v162
    %221 = vmatpush.msra.mxu0 %v161
    %222 = vmatpush.msra.mxu0 %v160
    %223 = vmatpush.msra.mxu0 %v159
    %224 = vmatpush.msra.mxu0 %v158
    %225 = vmatpush.msra.mxu0 %v157
    %226 = vmatmul.f32.gmra.mxu0 %v154
    %v227 = vpop.f32.mrf.mxu0
    %v228 = vadd.f32 %v208, %v227
    %229 = vdwg.mxu0
    %s230 = scalar_lea.vmem [#allocation7], 2
    %v231 = vld [vmem:[%s230] sm:$0x1]
    %v233 = vperm.slane %v231, 0
    %v235 = vadd.f32 %v228, %v233
    %236 = vst [vmem:[#allocation8] sm:$0xff] %v235
    // Predicated region
    $region26: #{tpu_custom_call.1} parent=1 // pred_check
      _
    $region27: #{tpu_custom_call.1} parent=1 // pred_check_branch
      %238 = sbr.rel (0) target = $region29
    $region28: #{tpu_custom_call.1} parent=1 // pred_region
      %240 = vsyncadd [#allocation4], 0
      %s242 = sshll.u32 [#allocation8], 4
      %s243 = int_to_ptr.vmem [resolvable:$true] %s242
      %s244 = sshll.u32 %s3, 4
      %s245 = int_to_ptr.hbm [resolvable:$true] %s244
      %247 = dma.vmem_to_hbm [thread:$0]  %s243, 128, %s245, [#allocation4]
    $region29: #{tpu_custom_call.1} parent=1 // pred_fallthru
      _
    // Predicated region
    $region30: #{tpu_custom_call.1} parent=1 // pred_check
      _
    $region31: #{tpu_custom_call.1} parent=1 // pred_check_branch
      %249 = sbr.rel (0) target = $region33
    $region32: #{tpu_custom_call.1} parent=1 // pred_region
      %251 = dma.done [#allocation4], 128
    $region33: #{tpu_custom_call.1} parent=1 // pred_fallthru
      _
    %252 = vsyncpa [#allocation3], 1
    %253 = vsyncpa [#allocation6], 1
    %254 = vsyncpa [#allocation4], 1

// kernel: tpu_custom_call.1
$region0: #{tpu_custom_call.1}
  #allocation0 [shape = 'u32[]', space=smem, size = 0x4, offset = 0x4, fixed_abs, tag = 'smem constant byte address 0x4 - core index']
  #allocation1 [shape = 'u32[72,128]{1,0:T(1,128)}', space=vmem, size = 0x9000, scoped, tag = 'internal scratch']
  %s0 = inlined_call_operand.hbm [shape: f32[2,8,128], index: 0, kind: input, shape index: {}]
  %s1 = inlined_call_operand.hbm [shape: f32[4,128,128], index: 1, kind: input, shape index: {}]
  %s2 = inlined_call_operand.hbm [shape: f32[3,1,128], index: 2, kind: input, shape index: {}]
  %s3 = inlined_call_operand.hbm [shape: f32[8,128], index: 3, kind: output, shape index: {}]
  %s4 = sld [smem:[#allocation0]]
  $region34: #{tpu_custom_call.1} parent=0
    _
  %s6 = ssub.s32 1, %s4
  %s7 = scalar_select 0, %s6, %s4
  $region1: #{tpu_custom_call.1} parent=0
    #allocation2 [shape = 'u8[8192]{0}', space=vmem, size = 0x2000, scoped, tag = 'input window, operand 0, single buffered']
    #allocation3 [shape = 's32[1]{0}', space=sflag, size = 0x4, scoped, tag = 'scoped memory for tpu_custom_call.1']
    #allocation4 [shape = 's32[1]{0}', space=sflag, size = 0x4, scoped, tag = 'scoped memory for tpu_custom_call.1']
    #allocation5 [shape = 'u8[262144]{0}', space=vmem, size = 0x40000, scoped, tag = 'input window, operand 1, single buffered']
    #allocation6 [shape = 's32[1]{0}', space=sflag, size = 0x4, scoped, tag = 'scoped memory for tpu_custom_call.1']
    #allocation7 [shape = 'u8[1536]{0}', space=vmem, size = 0x800, scoped, tag = 'input window, operand 2, single buffered']
    #allocation8 [shape = 'u8[4096]{0}', space=vmem, size = 0x1000, scoped, tag = 'output window, operand 0, single buffered']
    %8 = vsyncpa [#allocation3], 0
    %9 = vsyncpa [#allocation6], 0
    %10 = vsyncpa [#allocation4], 0
    // Predicated region
    $region2: #{tpu_custom_call.1} parent=1 // pred_check
      _
    $region3: #{tpu_custom_call.1} parent=1 // pred_check_branch
      %12 = sbr.rel (0) target = $region5
    $region4: #{tpu_custom_call.1} parent=1 // pred_region
      %14 = vsyncadd [#allocation3], 0
      %s15 = sshll.u32 %s0, 4
      %s16 = int_to_ptr.hbm [resolvable:$true] %s15
      %s17 = sshll.u32 [#allocation2], 4
      %s18 = int_to_ptr.vmem [resolvable:$true] %s17
      %23 = dma.hbm_to_vmem [thread:$0]  %s16, 256, %s18, [#allocation3], 128, 128, 8
    $region5: #{tpu_custom_call.1} parent=1 // pred_fallthru
      _
    // Predicated region
    $region6: #{tpu_custom_call.1} parent=1 // pred_check
      _
    $region7: #{tpu_custom_call.1} parent=1 // pred_check_branch
      %25 = sbr.rel (0) target = $region9
    $region8: #{tpu_custom_call.1} parent=1 // pred_region
      %27 = vsyncadd [#allocation6], 0
      %s28 = sshll.u32 %s1, 4
      %s29 = int_to_ptr.hbm [resolvable:$true] %s28
      %s30 = sshll.u32 [#allocation5], 4
      %s31 = int_to_ptr.vmem [resolvable:$true] %s30
      %36 = dma.hbm_to_vmem [thread:$0]  %s29, 8192, %s31, [#allocation6], 128, 128, 8
    $region9: #{tpu_custom_call.1} parent=1 // pred_fallthru
      _
    // Predicated region
    $region10: #{tpu_custom_call.1} parent=1 // pred_check
      _
    $region11: #{tpu_custom_call.1} parent=1 // pred_check_branch
      %38 = sbr.rel (0) target = $region13
    $region12: #{tpu_custom_call.1} parent=1 // pred_region
      %40 = vsyncadd [#allocation6], 0
      %s41 = sshll.u32 %s2, 4
      %s42 = int_to_ptr.hbm [resolvable:$true] %s41
      %s43 = sshll.u32 [#allocation7], 4
      %s44 = int_to_ptr.vmem [resolvable:$true] %s43
      %49 = dma.hbm_to_vmem [thread:$0]  %s42, 48, %s44, [#allocation6], 16, 16, 1
    $region13: #{tpu_custom_call.1} parent=1 // pred_fallthru
      _
    // Predicated region
    $region14: #{tpu_custom_call.1} parent=1 // pred_check
      _
    $region15: #{tpu_custom_call.1} parent=1 // pred_check_branch
      %51 = sbr.rel (0) target = $region17
    $region16: #{tpu_custom_call.1} parent=1 // pred_region
      %53 = dma.done [#allocation3], 256
    $region17: #{tpu_custom_call.1} parent=1 // pred_fallthru
      _
    // Predicated region
    $region18: #{tpu_custom_call.1} parent=1 // pred_check
      _
    $region19: #{tpu_custom_call.1} parent=1 // pred_check_branch
      %55 = sbr.rel (0) target = $region21
    $region20: #{tpu_custom_call.1} parent=1 // pred_region
      %57 = dma.done [#allocation6], 8192
    $region21: #{tpu_custom_call.1} parent=1 // pred_fallthru
      _
    // Predicated region
    $region22: #{tpu_custom_call.1} parent=1 // pred_check
      _
    $region23: #{tpu_custom_call.1} parent=1 // pred_check_branch
      %59 = sbr.rel (0) target = $region25
    $region24: #{tpu_custom_call.1} parent=1 // pred_region
      %61 = dma.done [#allocation6], 48
    $region25: #{tpu_custom_call.1} parent=1 // pred_fallthru
      _
    %v62 = vld [vmem:[#allocation2] sm:$0xff]
    %v63 = vld [vmem:[#allocation2 + $0x8] sm:$0xff]
    %v64 = vld [vmem:[#allocation5] sm:$0xff]
    %v65 = vld [vmem:[#allocation5 + $0x8] sm:$0xff]
    %v66 = vld [vmem:[#allocation5 + $0x10] sm:$0xff]
    %v67 = vld [vmem:[#allocation5 + $0x18] sm:$0xff]
    %v68 = vld [vmem:[#allocation5 + $0x20] sm:$0xff]
    %v69 = vld [vmem:[#allocation5 + $0x28] sm:$0xff]
    %v70 = vld [vmem:[#allocation5 + $0x30] sm:$0xff]
    %v71 = vld [vmem:[#allocation5 + $0x38] sm:$0xff]
    %v72 = vld [vmem:[#allocation5 + $0x40] sm:$0xff]
    %v73 = vld [vmem:[#allocation5 + $0x48] sm:$0xff]
    %v74 = vld [vmem:[#allocation5 + $0x50] sm:$0xff]
    %v75 = vld [vmem:[#allocation5 + $0x58] sm:$0xff]
    %v76 = vld [vmem:[#allocation5 + $0x60] sm:$0xff]
    %v77 = vld [vmem:[#allocation5 + $0x68] sm:$0xff]
    %v78 = vld [vmem:[#allocation5 + $0x70] sm:$0xff]
    %v79 = vld [vmem:[#allocation5 + $0x78] sm:$0xff]
    %v80 = vld [vmem:[#allocation7] sm:$0x1]
    %v82 = vperm.slane %v80, 0
    %84 = vmatpush.msra.mxu0 %v79
    %85 = vmatpush.msra.mxu0 %v78
    %86 = vmatpush.msra.mxu0 %v77
    %87 = vmatpush.msra.mxu0 %v76
    %88 = vmatpush.msra.mxu0 %v75
    %89 = vmatpush.msra.mxu0 %v74
    %90 = vmatpush.msra.mxu0 %v73
    %91 = vmatpush.msra.mxu0 %v72
    %92 = vmatpush.msra.mxu0 %v71
    %93 = vmatpush.msra.mxu0 %v70
    %94 = vmatpush.msra.mxu0 %v69
    %95 = vmatpush.msra.mxu0 %v68
    %96 = vmatpush.msra.mxu0 %v67
    %97 = vmatpush.msra.mxu0 %v66
    %98 = vmatpush.msra.mxu0 %v65
    %99 = vmatpush.msra.mxu0 %v64
    %100 = vmatmul.f32.gmra.mxu0 %v62
    %v101 = vpop.f32.mrf.mxu0
    %v102 = vadd.f32 %v82, %v101
    %103 = vmatmul.f32.gmra.mxu0 %v63
    %v104 = vpop.f32.mrf.mxu0
    %v105 = vadd.f32 %v82, %v104
    %106 = vdwg.mxu0
    %v107 = vmax.f32 %v102, 0.0
    %v108 = vmax.f32 %v105, 0.0
    %s109 = scalar_lea.vmem [#allocation5], 128
    %v110 = vld [vmem:[%s109] sm:$0xff]
    %v111 = vld [vmem:[%s109 + $0x8] sm:$0xff]
    %v112 = vld [vmem:[%s109 + $0x10] sm:$0xff]
    %v113 = vld [vmem:[%s109 + $0x18] sm:$0xff]
    %v114 = vld [vmem:[%s109 + $0x20] sm:$0xff]
    %v115 = vld [vmem:[%s109 + $0x28] sm:$0xff]
    %v116 = vld [vmem:[%s109 + $0x30] sm:$0xff]
    %v117 = vld [vmem:[%s109 + $0x38] sm:$0xff]
    %v118 = vld [vmem:[%s109 + $0x40] sm:$0xff]
    %v119 = vld [vmem:[%s109 + $0x48] sm:$0xff]
    %v120 = vld [vmem:[%s109 + $0x50] sm:$0xff]
    %v121 = vld [vmem:[%s109 + $0x58] sm:$0xff]
    %v122 = vld [vmem:[%s109 + $0x60] sm:$0xff]
    %v123 = vld [vmem:[%s109 + $0x68] sm:$0xff]
    %v124 = vld [vmem:[%s109 + $0x70] sm:$0xff]
    %v125 = vld [vmem:[%s109 + $0x78] sm:$0xff]
    %s126 = scalar_lea.vmem [#allocation7], 1
    %v127 = vld [vmem:[%s126] sm:$0x1]
    %v129 = vperm.slane %v127, 0
    %131 = vmatpush.msra.mxu0 %v125
    %132 = vmatpush.msra.mxu0 %v124
    %133 = vmatpush.msra.mxu0 %v123
    %134 = vmatpush.msra.mxu0 %v122
    %135 = vmatpush.msra.mxu0 %v121
    %136 = vmatpush.msra.mxu0 %v120
    %137 = vmatpush.msra.mxu0 %v119
    %138 = vmatpush.msra.mxu0 %v118
    %139 = vmatpush.msra.mxu0 %v117
    %140 = vmatpush.msra.mxu0 %v116
    %141 = vmatpush.msra.mxu0 %v115
    %142 = vmatpush.msra.mxu0 %v114
    %143 = vmatpush.msra.mxu0 %v113
    %144 = vmatpush.msra.mxu0 %v112
    %145 = vmatpush.msra.mxu0 %v111
    %146 = vmatpush.msra.mxu0 %v110
    %147 = vmatmul.f32.gmra.mxu0 %v107
    %v148 = vpop.f32.mrf.mxu0
    %v149 = vadd.f32 %v129, %v148
    %150 = vmatmul.f32.gmra.mxu0 %v108
    %v151 = vpop.f32.mrf.mxu0
    %v152 = vadd.f32 %v129, %v151
    %153 = vdwg.mxu0
    %v154 = vmax.f32 %v149, 0.0
    %v155 = vmax.f32 %v152, 0.0
    %s156 = scalar_lea.vmem [#allocation5], 256
    %v157 = vld [vmem:[%s156] sm:$0xff]
    %v158 = vld [vmem:[%s156 + $0x8] sm:$0xff]
    %v159 = vld [vmem:[%s156 + $0x10] sm:$0xff]
    %v160 = vld [vmem:[%s156 + $0x18] sm:$0xff]
    %v161 = vld [vmem:[%s156 + $0x20] sm:$0xff]
    %v162 = vld [vmem:[%s156 + $0x28] sm:$0xff]
    %v163 = vld [vmem:[%s156 + $0x30] sm:$0xff]
    %v164 = vld [vmem:[%s156 + $0x38] sm:$0xff]
    %v165 = vld [vmem:[%s156 + $0x40] sm:$0xff]
    %v166 = vld [vmem:[%s156 + $0x48] sm:$0xff]
    %v167 = vld [vmem:[%s156 + $0x50] sm:$0xff]
    %v168 = vld [vmem:[%s156 + $0x58] sm:$0xff]
    %v169 = vld [vmem:[%s156 + $0x60] sm:$0xff]
    %v170 = vld [vmem:[%s156 + $0x68] sm:$0xff]
    %v171 = vld [vmem:[%s156 + $0x70] sm:$0xff]
    %v172 = vld [vmem:[%s156 + $0x78] sm:$0xff]
    %s173 = scalar_lea.vmem [#allocation5], 384
    %v174 = vld [vmem:[%s173] sm:$0xff]
    %v175 = vld [vmem:[%s173 + $0x8] sm:$0xff]
    %v176 = vld [vmem:[%s173 + $0x10] sm:$0xff]
    %v177 = vld [vmem:[%s173 + $0x18] sm:$0xff]
    %v178 = vld [vmem:[%s173 + $0x20] sm:$0xff]
    %v179 = vld [vmem:[%s173 + $0x28] sm:$0xff]
    %v180 = vld [vmem:[%s173 + $0x30] sm:$0xff]
    %v181 = vld [vmem:[%s173 + $0x38] sm:$0xff]
    %v182 = vld [vmem:[%s173 + $0x40] sm:$0xff]
    %v183 = vld [vmem:[%s173 + $0x48] sm:$0xff]
    %v184 = vld [vmem:[%s173 + $0x50] sm:$0xff]
    %v185 = vld [vmem:[%s173 + $0x58] sm:$0xff]
    %v186 = vld [vmem:[%s173 + $0x60] sm:$0xff]
    %v187 = vld [vmem:[%s173 + $0x68] sm:$0xff]
    %v188 = vld [vmem:[%s173 + $0x70] sm:$0xff]
    %v189 = vld [vmem:[%s173 + $0x78] sm:$0xff]
    %190 = vmatpush.msra.mxu0 %v189
    %191 = vmatpush.msra.mxu0 %v188
    %192 = vmatpush.msra.mxu0 %v187
    %193 = vmatpush.msra.mxu0 %v186
    %194 = vmatpush.msra.mxu0 %v185
    %195 = vmatpush.msra.mxu0 %v184
    %196 = vmatpush.msra.mxu0 %v183
    %197 = vmatpush.msra.mxu0 %v182
    %198 = vmatpush.msra.mxu0 %v181
    %199 = vmatpush.msra.mxu0 %v180
    %200 = vmatpush.msra.mxu0 %v179
    %201 = vmatpush.msra.mxu0 %v178
    %202 = vmatpush.msra.mxu0 %v177
    %203 = vmatpush.msra.mxu0 %v176
    %204 = vmatpush.msra.mxu0 %v175
    %205 = vmatpush.msra.mxu0 %v174
    %206 = vmatmul.f32.gmra.mxu0 %v155
    %v207 = vpop.f32.mrf.mxu0
    %v208 = vadd.f32 0.0, %v207
    %209 = vdwg.mxu0
    %210 = vmatpush.msra.mxu0 %v172
    %211 = vmatpush.msra.mxu0 %v171
    %212 = vmatpush.msra.mxu0 %v170
    %213 = vmatpush.msra.mxu0 %v169
    %214 = vmatpush.msra.mxu0 %v168
    %215 = vmatpush.msra.mxu0 %v167
    %216 = vmatpush.msra.mxu0 %v166
    %217 = vmatpush.msra.mxu0 %v165
    %218 = vmatpush.msra.mxu0 %v164
    %219 = vmatpush.msra.mxu0 %v163
    %220 = vmatpush.msra.mxu0 %v162
    %221 = vmatpush.msra.mxu0 %v161
    %222 = vmatpush.msra.mxu0 %v160
    %223 = vmatpush.msra.mxu0 %v159
    %224 = vmatpush.msra.mxu0 %v158
    %225 = vmatpush.msra.mxu0 %v157
    %226 = vmatmul.f32.gmra.mxu0 %v154
    %v227 = vpop.f32.mrf.mxu0
    %v228 = vadd.f32 %v208, %v227
    %229 = vdwg.mxu0
    %s230 = scalar_lea.vmem [#allocation7], 2
    %v231 = vld [vmem:[%s230] sm:$0x1]
    %v233 = vperm.slane %v231, 0
    %v235 = vadd.f32 %v228, %v233
    %236 = vst [vmem:[#allocation8] sm:$0xff] %v235
    // Predicated region
    $region26: #{tpu_custom_call.1} parent=1 // pred_check
      _
    $region27: #{tpu_custom_call.1} parent=1 // pred_check_branch
      %238 = sbr.rel (0) target = $region29
    $region28: #{tpu_custom_call.1} parent=1 // pred_region
      %240 = vsyncadd [#allocation4], 0
      %s242 = sshll.u32 [#allocation8], 4
      %s243 = int_to_ptr.vmem [resolvable:$true] %s242
      %s244 = sshll.u32 %s3, 4
      %s245 = int_to_ptr.hbm [resolvable:$true] %s244
      %247 = dma.vmem_to_hbm [thread:$0]  %s243, 128, %s245, [#allocation4]
    $region29: #{tpu_custom_call.1} parent=1 // pred_fallthru
      _
    // Predicated region
    $region30: #{tpu_custom_call.1} parent=1 // pred_check
      _
    $region31: #{tpu_custom_call.1} parent=1 // pred_check_branch
      %249 = sbr.rel (0) target = $region33
    $region32: #{tpu_custom_call.1} parent=1 // pred_region
      %251 = dma.done [#allocation4], 128
    $region33: #{tpu_custom_call.1} parent=1 // pred_fallthru
      _
    %252 = vsyncpa [#allocation3], 1
    %253 = vsyncpa [#allocation6], 1
    %254 = vsyncpa [#allocation4], 1

</llo_original>
